<compile_context>
chip_gen: v6e
topology: v6e:2x2x1
jax: 0.10.0
libtpu: 0.0.40
codegen_flags: <defaults>
</compile_context>

<pallas_src>
import jax
import jax.numpy as jnp
from jax.experimental import pallas as pl
from jax.experimental.pallas import tpu as pltpu

_LANE = 128


def _round_up(n, m):
    return ((n + m - 1) // m) * m


def policy_net_kernel(x_ref, w1_ref, b1_ref, w2_ref, b2_ref, out_ref):
    # Hidden layer: relu(x @ W1 + b1). bf16 operands, f32 MXU accumulation.
    h = jnp.dot(x_ref[...], w1_ref[...], preferred_element_type=jnp.float32)
    h = jnp.maximum(h + b1_ref[...], 0.0)          # b1 is [1, H], f32

    # Output layer: relu(h @ (15*W2) + 15*b2)  (15x folded into the params).
    # Weights are tiny and VMEM-resident, so this matmul stays f32 to match
    # the PyTorch reference as closely as possible.
    o = jnp.dot(h, w2_ref[...], preferred_element_type=jnp.float32)
    out_ref[...] = jnp.maximum(o + b2_ref[...], 0.0).astype(out_ref.dtype)


def prepare_policy_params(w1, b1, w2, b2, scale=15.0):
    """One-time param transform.

    w1: [H, S], b1: [H], w2: [A, H], b2: [A]  (PyTorch nn.Linear layout)
    Returns (w1_t bf16 [S,H], b1 [1,H] f32, w2s_t f32 [H,A_pad],
             b2s [1,A_pad] f32, A) with the 15x scale folded into w2/b2 and the
    output columns zero-padded to a lane-dense multiple of 128.
    """
    H, S = w1.shape
    A = w2.shape[0]
    a_pad = _round_up(A, _LANE)

    w1_t = jnp.asarray(w1, jnp.float32).T.astype(jnp.bfloat16)      # [S, H]
    b1_r = jnp.asarray(b1, jnp.float32).reshape(1, H)

    w2s = scale * jnp.asarray(w2, jnp.float32)                       # [A, H]
    b2s = scale * jnp.asarray(b2, jnp.float32)                       # [A]
    w2s_t = jnp.zeros((H, a_pad), jnp.float32).at[:, :A].set(w2s.T)  # [H, A_pad]
    b2s_r = jnp.zeros((1, a_pad), jnp.float32).at[:, :A].set(b2s)    # [1, A_pad]
    return w1_t, b1_r, w2s_t, b2s_r, A


def policy_net_forward(x, w1_t, b1, w2_t, b2, num_actions, *, tm=1024):
    """x: [B, S] (any float dtype). Returns mu: [B, num_actions] f32."""
    B, S = x.shape
    H = w1_t.shape[1]
    a_pad = w2_t.shape[1]

    # Halve the HBM-bound x stream.
    x_bf16 = x.astype(jnp.bfloat16)

    # Batch tile: multiple of 16 (bf16 sublane packing), capped by the batch.
    tm_eff = min(tm, _round_up(B, 16))
    b_pad = _round_up(B, tm_eff)
    if b_pad != B:
        x_bf16 = jnp.pad(x_bf16, ((0, b_pad - B), (0, 0)))

    grid = (b_pad // tm_eff,)

    out = pl.pallas_call(
        policy_net_kernel,
        out_shape=jax.ShapeDtypeStruct((b_pad, a_pad), jnp.float32),
        grid_spec=pl.GridSpec(
            grid=grid,
            in_specs=[
                pl.BlockSpec((tm_eff, S), lambda i: (i, 0)),   # x: streamed
                pl.BlockSpec((S, H), lambda i: (0, 0)),        # W1: resident
                pl.BlockSpec((1, H), lambda i: (0, 0)),        # b1: resident
                pl.BlockSpec((H, a_pad), lambda i: (0, 0)),    # W2: resident
                pl.BlockSpec((1, a_pad), lambda i: (0, 0)),    # b2: resident
            ],
            out_specs=pl.BlockSpec((tm_eff, a_pad), lambda i: (i, 0)),
        ),
        compiler_params=pltpu.CompilerParams(
            dimension_semantics=("parallel",)),
    )(x_bf16, w1_t, b1, w2_t, b2)

    # Drop batch padding and the lane padding of the output slab.
    return out[:B, :num_actions]


if __name__ == "__main__":
    # Shapes consistent with the module: state_dim=16, hidden_dim=256 (the
    # script's global), action_dim=4; small batch for the smoke test.
    B, state_dim, hidden_dim, action_dim = 8, 16, 256, 4

    key = jax.random.PRNGKey(0)
    k_x, k_w1, k_b1, k_w2, k_b2 = jax.random.split(key, 5)

    x = jax.random.normal(k_x, (B, state_dim), dtype=jnp.float32)

    # Deterministic synthetic params (mimic nn.Linear's uniform(-1/sqrt(fan_in), +)).
    bound1 = 1.0 / (state_dim ** 0.5)
    w1 = jax.random.uniform(k_w1, (hidden_dim, state_dim),
                            minval=-bound1, maxval=bound1, dtype=jnp.float32)
    b1 = jax.random.uniform(k_b1, (hidden_dim,),
                            minval=-bound1, maxval=bound1, dtype=jnp.float32)
    bound2 = 1.0 / (hidden_dim ** 0.5)
    w2 = jax.random.uniform(k_w2, (action_dim, hidden_dim),
                            minval=-bound2, maxval=bound2, dtype=jnp.float32)
    b2 = jax.random.uniform(k_b2, (action_dim,),
                            minval=-bound2, maxval=bound2, dtype=jnp.float32)

    # One-time parameter prep (transpose, bf16 W1, fold 15x, lane-pad outputs).
    w1_t, b1_r, w2s_t, b2s_r, A = prepare_policy_params(w1, b1, w2, b2)

    out = policy_net_forward(x, w1_t, b1_r, w2s_t, b2s_r, A)
    out = jax.block_until_ready(out)
    assert out.shape == (B, action_dim)

    # Reference 1: matched-precision (bf16 first matmul, f32 elsewhere).
    h_ref = jnp.maximum(
        jnp.dot(x.astype(jnp.bfloat16), w1.T.astype(jnp.bfloat16),
                preferred_element_type=jnp.float32) + b1, 0.0)
    mu_ref = 15.0 * jnp.maximum(h_ref @ w2.T + b2, 0.0)
    assert jnp.allclose(out, mu_ref, atol=2e-2, rtol=2e-2)

    # Reference 2: pure-f32 PyTorch-equivalent forward (loose tolerance for
    # the deliberate bf16 cast of x/W1).
    h32 = jnp.maximum(x @ w1.T + b1, 0.0)
    mu32 = 15.0 * jnp.maximum(h32 @ w2.T + b2, 0.0)
    assert jnp.allclose(out, mu32, atol=0.15, rtol=0.05)

    print("KERNEL_OK")
</pallas_src>

<mosaic_0001>
module attributes {stable_mosaic.version = 11 : i64} {
  func.func @policy_net_kernel(%arg0: i32, %arg1: memref<16x16xbf16, #tpu.memory_space<vmem>>, %arg2: memref<16x256xbf16, #tpu.memory_space<vmem>>, %arg3: memref<1x256xf32, #tpu.memory_space<vmem>>, %arg4: memref<256x128xf32, #tpu.memory_space<vmem>>, %arg5: memref<1x128xf32, #tpu.memory_space<vmem>>, %arg6: memref<16x128xf32, #tpu.memory_space<vmem>>) attributes {dimension_semantics = [#tpu.dimension_semantics<parallel>], iteration_bounds = array<i64: 1>, scalar_prefetch = 0 : i64, scratch_operands = 0 : i64, tpu.core_type = #tpu.core_type<tc>, window_params = [{transform_indices = @transform_0, window_bounds = array<i64: 16, 16>}, {pipeline_mode = #tpu.pipeline_mode<synchronous>, transform_indices = @transform_1, window_bounds = array<i64: 16, 256>}, {pipeline_mode = #tpu.pipeline_mode<synchronous>, transform_indices = @transform_2, window_bounds = array<i64: 1, 256>}, {pipeline_mode = #tpu.pipeline_mode<synchronous>, transform_indices = @transform_3, window_bounds = array<i64: 256, 128>}, {pipeline_mode = #tpu.pipeline_mode<synchronous>, transform_indices = @transform_4, window_bounds = array<i64: 1, 128>}, {transform_indices = @transform_5, window_bounds = array<i64: 16, 128>}]} {
    %c0 = arith.constant 0 : index
    %c0_0 = arith.constant 0 : index
    %0 = vector.load %arg1[%c0, %c0_0] : memref<16x16xbf16, #tpu.memory_space<vmem>>, vector<16x16xbf16>
    %c0_1 = arith.constant 0 : index
    %c0_2 = arith.constant 0 : index
    %1 = vector.load %arg2[%c0_1, %c0_2] : memref<16x256xbf16, #tpu.memory_space<vmem>>, vector<16x256xbf16>
    %cst = arith.constant dense<0.000000e+00> : vector<16x256xf32>
    %2 = tpu.matmul %0, %1, %cst {dimension_numbers = #tpu.dot_dimension_numbers<[1], [0], [0], [1], [0, 0, 1, 1], [], []>} : vector<16x16xbf16>, vector<16x256xbf16>, vector<16x256xf32> -> vector<16x256xf32>
    %c0_3 = arith.constant 0 : index
    %c0_4 = arith.constant 0 : index
    %3 = vector.load %arg3[%c0_3, %c0_4] : memref<1x256xf32, #tpu.memory_space<vmem>>, vector<1x256xf32>
    %4 = vector.broadcast %3 : vector<1x256xf32> to vector<16x256xf32>
    %5 = arith.addf %2, %4 : vector<16x256xf32>
    %cst_5 = arith.constant 0.000000e+00 : f32
    %6 = vector.broadcast %cst_5 : f32 to vector<16x256xf32>
    %7 = arith.maximumf %5, %6 : vector<16x256xf32>
    %c0_6 = arith.constant 0 : index
    %c0_7 = arith.constant 0 : index
    %8 = vector.load %arg4[%c0_6, %c0_7] : memref<256x128xf32, #tpu.memory_space<vmem>>, vector<256x128xf32>
    %cst_8 = arith.constant dense<0.000000e+00> : vector<16x128xf32>
    %9 = tpu.matmul %7, %8, %cst_8 {dimension_numbers = #tpu.dot_dimension_numbers<[1], [0], [0], [1], [0, 0, 1, 1], [], []>} : vector<16x256xf32>, vector<256x128xf32>, vector<16x128xf32> -> vector<16x128xf32>
    %c0_9 = arith.constant 0 : index
    %c0_10 = arith.constant 0 : index
    %10 = vector.load %arg5[%c0_9, %c0_10] : memref<1x128xf32, #tpu.memory_space<vmem>>, vector<1x128xf32>
    %11 = vector.broadcast %10 : vector<1x128xf32> to vector<16x128xf32>
    %12 = arith.addf %9, %11 : vector<16x128xf32>
    %cst_11 = arith.constant 0.000000e+00 : f32
    %13 = vector.broadcast %cst_11 : f32 to vector<16x128xf32>
    %14 = arith.maximumf %12, %13 : vector<16x128xf32>
    %c0_12 = arith.constant 0 : index
    %c0_13 = arith.constant 0 : index
    %15 = vector.load %arg6[%c0_12, %c0_13] : memref<16x128xf32, #tpu.memory_space<vmem>>, vector<16x128xf32>
    tpu.vector_store %arg6[%c0_12, %c0_13], %14 {strides = array<i32>} : memref<16x128xf32, #tpu.memory_space<vmem>>, vector<16x128xf32>,
    return
  }
  func.func @transform_0(%arg0: i32) -> (i32, i32) {
    %c0_i32 = arith.constant 0 : i32
    %c0_i32_0 = arith.constant 0 : i32
    return %arg0, %c0_i32 : i32, i32
  }
  func.func @transform_1(%arg0: i32) -> (i32, i32) {
    %c0_i32 = arith.constant 0 : i32
    %c0_i32_0 = arith.constant 0 : i32
    %c0_i32_1 = arith.constant 0 : i32
    return %c0_i32, %c0_i32_0 : i32, i32
  }
  func.func @transform_2(%arg0: i32) -> (i32, i32) {
    %c0_i32 = arith.constant 0 : i32
    %c0_i32_0 = arith.constant 0 : i32
    %c0_i32_1 = arith.constant 0 : i32
    return %c0_i32, %c0_i32_0 : i32, i32
  }
  func.func @transform_3(%arg0: i32) -> (i32, i32) {
    %c0_i32 = arith.constant 0 : i32
    %c0_i32_0 = arith.constant 0 : i32
    %c0_i32_1 = arith.constant 0 : i32
    return %c0_i32, %c0_i32_0 : i32, i32
  }
  func.func @transform_4(%arg0: i32) -> (i32, i32) {
    %c0_i32 = arith.constant 0 : i32
    %c0_i32_0 = arith.constant 0 : i32
    %c0_i32_1 = arith.constant 0 : i32
    return %c0_i32, %c0_i32_0 : i32, i32
  }
  func.func @transform_5(%arg0: i32) -> (i32, i32) {
    %c0_i32 = arith.constant 0 : i32
    %c0_i32_0 = arith.constant 0 : i32
    return %arg0, %c0_i32 : i32, i32
  }
}

</mosaic_0001>

<llo_original>
// kernel: tpu_custom_call.1
$region0: #{tpu_custom_call.1}
  #allocation0 [shape = 'u32[]', space=smem, size = 0x4, offset = 0x4, fixed_abs, tag = 'smem constant byte address 0x4 - core index']
  #allocation1 [shape = 'u32[144,128]{1,0:T(1,128)}', space=vmem, size = 0x12000, scoped, tag = 'internal scratch']
  %s0 = inlined_call_operand.hbm [shape: bf16[16,16], index: 0, kind: input, shape index: {}]
  %s1 = inlined_call_operand.hbm [shape: bf16[16,256], index: 1, kind: input, shape index: {}]
  %s2 = inlined_call_operand.vmem [shape: f32[1,256], index: 2, kind: input, shape index: {}]
  %s3 = inlined_call_operand.hbm [shape: f32[256,128], index: 3, kind: input, shape index: {}]
  %s4 = inlined_call_operand.vmem [shape: f32[1,128], index: 4, kind: input, shape index: {}]
  %s5 = inlined_call_operand.hbm [shape: f32[16,128], index: 5, kind: output, shape index: {}]
  %s6 = sld [smem:[#allocation0]]
  $region42: #{tpu_custom_call.1} parent=0
    _
  %s8 = ssub.s32 1, %s6
  %s9 = scalar_select 0, %s8, %s6
  $region1: #{tpu_custom_call.1} parent=0
    #allocation2 [shape = 'u8[4096]{0}', space=vmem, size = 0x1000, scoped, tag = 'input window, operand 0, single buffered']
    #allocation3 [shape = 's32[1]{0}', space=sflag, size = 0x4, scoped, tag = 'scoped memory for tpu_custom_call.1']
    #allocation4 [shape = 's32[1]{0}', space=sflag, size = 0x4, scoped, tag = 'scoped memory for tpu_custom_call.1']
    #allocation5 [shape = 'u8[8192]{0}', space=vmem, size = 0x2000, scoped, tag = 'input window, operand 1, single buffered']
    #allocation6 [shape = 's32[1]{0}', space=sflag, size = 0x4, scoped, tag = 'scoped memory for tpu_custom_call.1']
    #allocation7 [shape = 'u8[131072]{0}', space=vmem, size = 0x20000, scoped, tag = 'input window, operand 3, single buffered']
    #allocation8 [shape = 'u8[8192]{0}', space=vmem, size = 0x2000, scoped, tag = 'output window, operand 0, single buffered']
    %10 = vsyncpa [#allocation3], 0
    %11 = vsyncpa [#allocation6], 0
    %12 = vsyncpa [#allocation4], 0
    // Predicated region
    $region2: #{tpu_custom_call.1} parent=1 // pred_check
      _
    $region3: #{tpu_custom_call.1} parent=1 // pred_check_branch
      %14 = sbr.rel (0) target = $region5
    $region4: #{tpu_custom_call.1} parent=1 // pred_region
      %s16 = ssub.s32 128, 128
      %17 = vsyncadd [#allocation3], %s16
      %s18 = sshll.u32 [#allocation2], 4
      %s19 = int_to_ptr.vmem [resolvable:$true] %s18
      %24 = dma.hbm_to_vmem [thread:$0]  %s0, 128, %s19, [#allocation3], 64, 64, 4
    $region5: #{tpu_custom_call.1} parent=1 // pred_fallthru
      _
    // Predicated region
    $region6: #{tpu_custom_call.1} parent=1 // pred_check
      _
    $region7: #{tpu_custom_call.1} parent=1 // pred_check_branch
      %26 = sbr.rel (0) target = $region9
    $region8: #{tpu_custom_call.1} parent=1 // pred_region
      %s28 = ssub.s32 256, 256
      %29 = vsyncadd [#allocation6], %s28
      %s30 = sshll.u32 [#allocation5], 4
      %s31 = int_to_ptr.vmem [resolvable:$true] %s30
      %36 = dma.hbm_to_vmem [thread:$0]  %s1, 256, %s31, [#allocation6], 128, 128, 8
    $region9: #{tpu_custom_call.1} parent=1 // pred_fallthru
      _
    // Predicated region
    $region10: #{tpu_custom_call.1} parent=1 // pred_check
      _
    $region11: #{tpu_custom_call.1} parent=1 // pred_check_branch
      %38 = sbr.rel (0) target = $region13
    $region12: #{tpu_custom_call.1} parent=1 // pred_region
      _
    $region13: #{tpu_custom_call.1} parent=1 // pred_fallthru
      _
    // Predicated region
    $region14: #{tpu_custom_call.1} parent=1 // pred_check
      _
    $region15: #{tpu_custom_call.1} parent=1 // pred_check_branch
      %40 = sbr.rel (0) target = $region17
    $region16: #{tpu_custom_call.1} parent=1 // pred_region
      %s42 = ssub.s32 4096, 4096
      %43 = vsyncadd [#allocation6], %s42
      %s44 = sshll.u32 [#allocation7], 4
      %s45 = int_to_ptr.vmem [resolvable:$true] %s44
      %50 = dma.hbm_to_vmem [thread:$0]  %s3, 4096, %s45, [#allocation6], 128, 128, 8
    $region17: #{tpu_custom_call.1} parent=1 // pred_fallthru
      _
    // Predicated region
    $region18: #{tpu_custom_call.1} parent=1 // pred_check
      _
    $region19: #{tpu_custom_call.1} parent=1 // pred_check_branch
      %52 = sbr.rel (0) target = $region21
    $region20: #{tpu_custom_call.1} parent=1 // pred_region
      _
    $region21: #{tpu_custom_call.1} parent=1 // pred_fallthru
      _
    // Predicated region
    $region22: #{tpu_custom_call.1} parent=1 // pred_check
      _
    $region23: #{tpu_custom_call.1} parent=1 // pred_check_branch
      %54 = sbr.rel (0) target = $region25
    $region24: #{tpu_custom_call.1} parent=1 // pred_region
      %55 = dma.done [#allocation3], 128
    $region25: #{tpu_custom_call.1} parent=1 // pred_fallthru
      _
    // Predicated region
    $region26: #{tpu_custom_call.1} parent=1 // pred_check
      _
    $region27: #{tpu_custom_call.1} parent=1 // pred_check_branch
      %57 = sbr.rel (0) target = $region29
    $region28: #{tpu_custom_call.1} parent=1 // pred_region
      %58 = dma.done [#allocation6], 256
    $region29: #{tpu_custom_call.1} parent=1 // pred_fallthru
      _
    // Predicated region
    $region30: #{tpu_custom_call.1} parent=1 // pred_check
      _
    $region31: #{tpu_custom_call.1} parent=1 // pred_check_branch
      %60 = sbr.rel (0) target = $region33
    $region32: #{tpu_custom_call.1} parent=1 // pred_region
      %61 = dma.done [#allocation6], 4096
    $region33: #{tpu_custom_call.1} parent=1 // pred_fallthru
      _
    %v63 = vld [vmem:[#allocation2] sm:$0xf]
    %v64 = vld [vmem:[#allocation2 + $0x4] sm:$0xf]
    %v65 = vld [vmem:[#allocation5] sm:$0xff]
    %v66 = vld [vmem:[#allocation5 + $0x8] sm:$0xff]
    %v67 = vld [vmem:[%s2] sm:$0x3]
    %v69 = vlaneseq
    %v70 = vshrl.u32 %v69, 7
    %v71 = vsub.s32 0, %v70
    %v72 = vrot.slane %v67, %v71
    %v73 = vlaneseq
    %v74 = vshrl.u32 %v73, 7
    %v75 = vsub.s32 1, %v74
    %v76 = vrot.slane %v67, %v75
    %v81 = vunpack.c.l.b16 %v63
    %v82 = vunpack.c.l.b16 %v64
    %v83 = vpack.c.b16 %v82, %v81
    %v86 = vunpack.c.l.b16 %v65
    %v87 = vunpack.c.h.b16 %v65
    %v88 = vunpack.c.l.b16 %v66
    %v89 = vunpack.c.h.b16 %v66
    %v90 = vpack.c.b16 %v88, %v86
    %v91 = vpack.c.b16 %v89, %v87
    %vm94 = vcmask 130048
    %v96 = vsel %vm94, %v83, 0
    %98 = vmatprep.subr.bf16.mxu0 0
    %99 = vmatpush1.bf16.msra.mxu0 0
    %100 = vmatprep.subr.bf16.mxu0 0
    %101 = vmatpush1.bf16.msra.mxu0 0
    %102 = vmatprep.subr.bf16.mxu0 0
    %103 = vmatpush1.bf16.msra.mxu0 0
    %104 = vmatprep.subr.bf16.mxu0 0
    %105 = vmatpush1.bf16.msra.mxu0 0
    %106 = vmatprep.subr.bf16.mxu0 0
    %107 = vmatpush1.bf16.msra.mxu0 0
    %108 = vmatprep.subr.bf16.mxu0 0
    %109 = vmatpush1.bf16.msra.mxu0 0
    %110 = vmatprep.subr.bf16.mxu0 0
    %111 = vmatpush1.bf16.msra.mxu0 0
    %112 = vmatprep.subr.bf16.mxu0 %v91
    %113 = vmatpush1.bf16.msra.mxu0 %v90
    %114 = vmatprep.subr.bf16.mxu0 0
    %115 = vmatpush2.bf16.msra.mxu0 0
    %116 = vmatprep.subr.bf16.mxu0 0
    %117 = vmatpush2.bf16.msra.mxu0 0
    %118 = vmatprep.subr.bf16.mxu0 0
    %119 = vmatpush2.bf16.msra.mxu0 0
    %120 = vmatprep.subr.bf16.mxu0 0
    %121 = vmatpush2.bf16.msra.mxu0 0
    %122 = vmatprep.subr.bf16.mxu0 0
    %123 = vmatpush2.bf16.msra.mxu0 0
    %124 = vmatprep.subr.bf16.mxu0 0
    %125 = vmatpush2.bf16.msra.mxu0 0
    %126 = vmatprep.subr.bf16.mxu0 0
    %127 = vmatpush2.bf16.msra.mxu0 0
    %128 = vmatprep.subr.bf16.mxu0 0
    %129 = vmatpush2.bf16.msra.mxu0 0
    %130 = vmatprep.mubr.bf16.mxu0 0
    %131 = vmatmul.mubr.bf16.gmra.mxu0 %v96
    %v132 = vpop.f32.mrf.mxu0
    %v133 = vadd.f32 %v72, %v132
    %v134 = vpop.f32.mrf.mxu0
    %v135 = vadd.f32 %v76, %v134
    %v136 = vpop.f32.mrf.mxu0
    %v137 = vadd.f32 %v72, %v136
    %v138 = vpop.f32.mrf.mxu0
    %v139 = vadd.f32 %v76, %v138
    %140 = vdwg.mxu0
    %v141 = vmax.f32 %v133, 0.0
    %v142 = vmax.f32 %v135, 0.0
    %v143 = vmax.f32 %v137, 0.0
    %v144 = vmax.f32 %v139, 0.0
    %v145 = vld [vmem:[#allocation7] sm:$0xff]
    %v146 = vld [vmem:[#allocation7 + $0x8] sm:$0xff]
    %v147 = vld [vmem:[#allocation7 + $0x10] sm:$0xff]
    %v148 = vld [vmem:[#allocation7 + $0x18] sm:$0xff]
    %v149 = vld [vmem:[#allocation7 + $0x20] sm:$0xff]
    %v150 = vld [vmem:[#allocation7 + $0x28] sm:$0xff]
    %v151 = vld [vmem:[#allocation7 + $0x30] sm:$0xff]
    %v152 = vld [vmem:[#allocation7 + $0x38] sm:$0xff]
    %v153 = vld [vmem:[#allocation7 + $0x40] sm:$0xff]
    %v154 = vld [vmem:[#allocation7 + $0x48] sm:$0xff]
    %v155 = vld [vmem:[#allocation7 + $0x50] sm:$0xff]
    %v156 = vld [vmem:[#allocation7 + $0x58] sm:$0xff]
    %v157 = vld [vmem:[#allocation7 + $0x60] sm:$0xff]
    %v158 = vld [vmem:[#allocation7 + $0x68] sm:$0xff]
    %v159 = vld [vmem:[#allocation7 + $0x70] sm:$0xff]
    %v160 = vld [vmem:[#allocation7 + $0x78] sm:$0xff]
    %v161 = vld [vmem:[#allocation7 + $0x80] sm:$0xff]
    %v162 = vld [vmem:[#allocation7 + $0x88] sm:$0xff]
    %v163 = vld [vmem:[#allocation7 + $0x90] sm:$0xff]
    %v164 = vld [vmem:[#allocation7 + $0x98] sm:$0xff]
    %v165 = vld [vmem:[#allocation7 + $0xa0] sm:$0xff]
    %v166 = vld [vmem:[#allocation7 + $0xa8] sm:$0xff]
    %v167 = vld [vmem:[#allocation7 + $0xb0] sm:$0xff]
    %v168 = vld [vmem:[#allocation7 + $0xb8] sm:$0xff]
    %v169 = vld [vmem:[#allocation7 + $0xc0] sm:$0xff]
    %v170 = vld [vmem:[#allocation7 + $0xc8] sm:$0xff]
    %v171 = vld [vmem:[#allocation7 + $0xd0] sm:$0xff]
    %v172 = vld [vmem:[#allocation7 + $0xd8] sm:$0xff]
    %v173 = vld [vmem:[#allocation7 + $0xe0] sm:$0xff]
    %v174 = vld [vmem:[#allocation7 + $0xe8] sm:$0xff]
    %v175 = vld [vmem:[#allocation7 + $0xf0] sm:$0xff]
    %v176 = vld [vmem:[#allocation7 + $0xf8] sm:$0xff]
    %v177 = vld [vmem:[%s4] sm:$0x1]
    %v179 = vlaneseq
    %v180 = vshrl.u32 %v179, 7
    %v181 = vsub.s32 0, %v180
    %v182 = vrot.slane %v177, %v181
    %184 = vmatprep.subr.mxu0 0.0
    %185 = vmatpush1.msra.mxu0 %v160
    %186 = vmatprep.subr.mxu0 0.0
    %187 = vmatpush1.msra.mxu0 %v159
    %188 = vmatprep.subr.mxu0 0.0
    %189 = vmatpush1.msra.mxu0 %v158
    %190 = vmatprep.subr.mxu0 0.0
    %191 = vmatpush1.msra.mxu0 %v157
    %192 = vmatprep.subr.mxu0 0.0
    %193 = vmatpush1.msra.mxu0 %v156
    %194 = vmatprep.subr.mxu0 0.0
    %195 = vmatpush1.msra.mxu0 %v155
    %196 = vmatprep.subr.mxu0 0.0
    %197 = vmatpush1.msra.mxu0 %v154
    %198 = vmatprep.subr.mxu0 0.0
    %199 = vmatpush1.msra.mxu0 %v153
    %200 = vmatprep.subr.mxu0 0.0
    %201 = vmatpush1.msra.mxu0 %v152
    %202 = vmatprep.subr.mxu0 0.0
    %203 = vmatpush1.msra.mxu0 %v151
    %204 = vmatprep.subr.mxu0 0.0
    %205 = vmatpush1.msra.mxu0 %v150
    %206 = vmatprep.subr.mxu0 0.0
    %207 = vmatpush1.msra.mxu0 %v149
    %208 = vmatprep.subr.mxu0 0.0
    %209 = vmatpush1.msra.mxu0 %v148
    %210 = vmatprep.subr.mxu0 0.0
    %211 = vmatpush1.msra.mxu0 %v147
    %212 = vmatprep.subr.mxu0 0.0
    %213 = vmatpush1.msra.mxu0 %v146
    %214 = vmatprep.subr.mxu0 0.0
    %215 = vmatpush1.msra.mxu0 %v145
    %216 = vmatprep.subr.mxu0 0.0
    %217 = vmatpush2.msra.mxu0 %v176
    %218 = vmatprep.subr.mxu0 0.0
    %219 = vmatpush2.msra.mxu0 %v175
    %220 = vmatprep.subr.mxu0 0.0
    %221 = vmatpush2.msra.mxu0 %v174
    %222 = vmatprep.subr.mxu0 0.0
    %223 = vmatpush2.msra.mxu0 %v173
    %224 = vmatprep.subr.mxu0 0.0
    %225 = vmatpush2.msra.mxu0 %v172
    %226 = vmatprep.subr.mxu0 0.0
    %227 = vmatpush2.msra.mxu0 %v171
    %228 = vmatprep.subr.mxu0 0.0
    %229 = vmatpush2.msra.mxu0 %v170
    %230 = vmatprep.subr.mxu0 0.0
    %231 = vmatpush2.msra.mxu0 %v169
    %232 = vmatprep.subr.mxu0 0.0
    %233 = vmatpush2.msra.mxu0 %v168
    %234 = vmatprep.subr.mxu0 0.0
    %235 = vmatpush2.msra.mxu0 %v167
    %236 = vmatprep.subr.mxu0 0.0
    %237 = vmatpush2.msra.mxu0 %v166
    %238 = vmatprep.subr.mxu0 0.0
    %239 = vmatpush2.msra.mxu0 %v165
    %240 = vmatprep.subr.mxu0 0.0
    %241 = vmatpush2.msra.mxu0 %v164
    %242 = vmatprep.subr.mxu0 0.0
    %243 = vmatpush2.msra.mxu0 %v163
    %244 = vmatprep.subr.mxu0 0.0
    %245 = vmatpush2.msra.mxu0 %v162
    %246 = vmatprep.subr.mxu0 0.0
    %247 = vmatpush2.msra.mxu0 %v161
    %248 = vmatprep.mubr.f32.mxu0 %v142
    %249 = vmatmul.mubr.f32.gmra.mxu0 %v141
    %v250 = vpop.f32.mrf.mxu0
    %v251 = vadd.f32 %v182, %v250
    %v252 = vpop.f32.mrf.mxu0
    %253 = vmatprep.mubr.f32.mxu0 %v144
    %254 = vmatmul.mubr.f32.gmra.mxu0 %v143
    %v255 = vpop.f32.mrf.mxu0
    %v256 = vadd.f32 %v182, %v255
    %v257 = vpop.f32.mrf.mxu0
    %258 = vdwg.mxu0
    %v259 = vmax.f32 %v251, 0.0
    %v260 = vmax.f32 %v256, 0.0
    %261 = vst [vmem:[#allocation8] sm:$0xff] %v259
    %262 = vst [vmem:[#allocation8 + $0x8] sm:$0xff] %v260
    // Predicated region
    $region34: #{tpu_custom_call.1} parent=1 // pred_check
      _
    $region35: #{tpu_custom_call.1} parent=1 // pred_check_branch
      %264 = sbr.rel (0) target = $region37
    $region36: #{tpu_custom_call.1} parent=1 // pred_region
      %s266 = ssub.s32 256, 256
      %267 = vsyncadd [#allocation4], %s266
      %s268 = sshll.u32 [#allocation8], 4
      %s269 = int_to_ptr.vmem [resolvable:$true] %s268
      %274 = dma.vmem_to_hbm [thread:$0]  %s269, 256, %s5, [#allocation4], 128, 128, 8
    $region37: #{tpu_custom_call.1} parent=1 // pred_fallthru
      _
    // Predicated region
    $region38: #{tpu_custom_call.1} parent=1 // pred_check
      _
    $region39: #{tpu_custom_call.1} parent=1 // pred_check_branch
      %276 = sbr.rel (0) target = $region41
    $region40: #{tpu_custom_call.1} parent=1 // pred_region
      %277 = dma.done [#allocation4], 256
    $region41: #{tpu_custom_call.1} parent=1 // pred_fallthru
      _
    %278 = vsyncpa [#allocation3], 1
    %279 = vsyncpa [#allocation6], 1
    %280 = vsyncpa [#allocation4], 1

</llo_original>
